<compile_context>
chip_gen: v6e
topology: v6e:2x2x1
jax: 0.10.0
libtpu: 0.0.40
codegen_flags: <defaults>
</compile_context>

<pallas_src>
from functools import partial

import jax
import jax.numpy as jnp
from jax.experimental import pallas as pl
from jax.experimental.pallas import tpu as pltpu


# ----------------------------------------------------------------------------
# VGG16 `features` configuration (conv layers + pools), with the tap points
# that correspond to torchvision indices {2: conv1, 7: conv2, 14: conv3,
# 21: conv4, 28: conv5}.  Tapped activations are the conv outputs BEFORE ReLU
# (exactly as the PyTorch forward, which taps right after the Conv2d layer).
# ----------------------------------------------------------------------------
VGG16_CFG = [
    ("conv", 3, 64, None), ("conv", 64, 64, "conv1"), ("pool",),
    ("conv", 64, 128, None), ("conv", 128, 128, "conv2"), ("pool",),
    ("conv", 128, 256, None), ("conv", 256, 256, None), ("conv", 256, 256, "conv3"), ("pool",),
    ("conv", 256, 512, None), ("conv", 512, 512, None), ("conv", 512, 512, "conv4"), ("pool",),
    ("conv", 512, 512, None), ("conv", 512, 512, None), ("conv", 512, 512, "conv5"), ("pool",),
]

TAP_ORDER = ["conv1", "conv2", "conv3", "conv4", "conv5"]


# ----------------------------------------------------------------------------
# Pallas kernels
# ----------------------------------------------------------------------------
def _conv3x3_row_kernel(x0_ref, x1_ref, x2_ref, w_ref, b_ref, o_ref, *, relu, out_w):
    """One output row (all N samples) of a 3x3 'same' convolution.

    x{0,1,2}_ref: (1, N, W+2, Cin) bf16 -- padded input rows h, h+1, h+2
    w_ref:        (9, Cin, Cout)   bf16 -- taps ordered dh*3 + dw (resident)
    b_ref:        (1, Cout)        f32  -- resident
    o_ref:        (1, N, W, Cout)  bf16
    """
    rows = (x0_ref, x1_ref, x2_ref)
    _, n, _, cin = x0_ref.shape
    acc = None
    for dh in range(3):                                   # static unroll: 9 MXU matmuls
        xrow = rows[dh][0]                                # (N, W+2, Cin)
        for dw in range(3):
            xs = xrow[:, dw:dw + out_w, :].reshape(n * out_w, cin)
            contrib = jnp.dot(xs, w_ref[dh * 3 + dw],
                              preferred_element_type=jnp.float32)
            acc = contrib if acc is None else acc + contrib
    acc = acc + b_ref[...]                                # f32 bias
    if relu:
        acc = jnp.maximum(acc, 0.0)
    o_ref[...] = acc.reshape(o_ref.shape).astype(o_ref.dtype)


def _maxpool2x2_kernel(x_ref, o_ref, *, relu, c):
    """2x2 / stride-2 max pool (+ optional fused ReLU) on a (2*th, N, Wo, 2C) block."""
    x = x_ref[...]                                        # (2*th, N, Wo, 2C) bf16
    th2, n, wo, c2 = x.shape
    x = x.reshape(th2 // 2, 2, n, wo, c2)                 # leading-dim split (layout-free)
    m = jnp.maximum(x[:, 0], x[:, 1])                     # max over the H pair
    m = jnp.maximum(m[..., :c], m[..., c:])               # max over the W pair (lane split)
    if relu:
        m = jnp.maximum(m, 0.0)
    o_ref[...] = m.astype(o_ref.dtype)


# ----------------------------------------------------------------------------
# Pallas wrappers (activations use a channel-last (H, N, W, C) bf16 layout)
# ----------------------------------------------------------------------------
def conv3x3(x, w9, b2, *, relu):
    """3x3 'same' conv on an (H, N, W, Cin) bf16 activation -> (H, N, W, Cout) bf16.

    The padded input is passed three times with H-shifted BlockSpecs so each
    grid step reads exactly the three padded rows it needs; no im2col slab is
    ever materialized in HBM.  Weights/bias use constant index maps and stay
    resident in VMEM (DMA'd once).
    """
    H, N, W, Cin = x.shape
    Cout = w9.shape[-1]
    xp = jnp.pad(x, ((1, 1), (0, 0), (1, 1), (0, 0)))     # (H+2, N, W+2, Cin)

    def row_spec(off):
        return pl.BlockSpec((1, N, W + 2, Cin), lambda h, o=off: (h + o, 0, 0, 0))

    return pl.pallas_call(
        partial(_conv3x3_row_kernel, relu=relu, out_w=W),
        out_shape=jax.ShapeDtypeStruct((H, N, W, Cout), jnp.bfloat16),
        grid=(H,),
        in_specs=[
            row_spec(0), row_spec(1), row_spec(2),
            pl.BlockSpec((9, Cin, Cout), lambda h: (0, 0, 0)),   # resident weights
            pl.BlockSpec((1, Cout), lambda h: (0, 0)),           # resident bias
        ],
        out_specs=pl.BlockSpec((1, N, W, Cout), lambda h: (h, 0, 0, 0)),
        compiler_params=pltpu.CompilerParams(dimension_semantics=("parallel",)),
    )(xp, xp, xp, w9, b2)


def _largest_divisor_leq(n, cap):
    d = min(n, cap)
    while n % d:
        d -= 1
    return d


def maxpool2x2(x, *, relu):
    """MaxPool2d(2,2) (+ optional fused ReLU) on an (H, N, W, C) bf16 activation."""
    H, N, W, C = x.shape
    Ho, Wo = H // 2, W // 2
    xr = x.reshape(H, N, Wo, 2 * C)                       # free contiguous reshape
    th = _largest_divisor_leq(Ho, 8)                      # output rows per grid step
    return pl.pallas_call(
        partial(_maxpool2x2_kernel, relu=relu, c=C),
        out_shape=jax.ShapeDtypeStruct((Ho, N, Wo, C), jnp.bfloat16),
        grid=(Ho // th,),
        in_specs=[pl.BlockSpec((2 * th, N, Wo, 2 * C), lambda i: (i, 0, 0, 0))],
        out_specs=pl.BlockSpec((th, N, Wo, C), lambda i: (i, 0, 0, 0)),
        compiler_params=pltpu.CompilerParams(dimension_semantics=("parallel",)),
    )(xr)


# ----------------------------------------------------------------------------
# Full VGG forward (mirrors VGG.forward of the PyTorch module)
# ----------------------------------------------------------------------------
@jax.jit
def vgg_forward(x_nchw, params):
    """Returns ({tap_name: NCHW f32 pre-ReLU feature}, final pooled NCHW f32)."""
    x = jnp.transpose(x_nchw, (2, 0, 3, 1)).astype(jnp.bfloat16)   # NCHW -> (H,N,W,C)
    feats = {}
    pi = 0
    pending_relu = False
    for layer in VGG16_CFG:
        if layer[0] == "conv":
            _, cin, cout, tap = layer
            w, b = params[pi]
            pi += 1
            w9 = w.astype(jnp.bfloat16).reshape(9, cin, cout)      # (kh,kw,cin,cout)->(9,cin,cout)
            b2 = b.astype(jnp.float32).reshape(1, cout)
            if tap is None:
                x = conv3x3(x, w9, b2, relu=True)                  # conv + fused ReLU
                pending_relu = False
            else:
                x = conv3x3(x, w9, b2, relu=False)                 # tapped: pre-ReLU output
                feats[tap] = jnp.transpose(x, (1, 3, 0, 2)).astype(jnp.float32)  # NCHW
                pending_relu = True                                # ReLU fused into next pool
        else:  # ("pool",)
            x = maxpool2x2(x, relu=pending_relu)                   # relu∘max == max∘relu
            pending_relu = False
    return feats, jnp.transpose(x, (1, 3, 0, 2)).astype(jnp.float32)


def init_params(key):
    """Deterministic He-normal weights, zero biases (synthetic, not pretrained)."""
    params = []
    for layer in VGG16_CFG:
        if layer[0] != "conv":
            continue
        _, cin, cout, _ = layer
        key, kw = jax.random.split(key)
        fan_in = 9 * cin
        w = jax.random.normal(kw, (3, 3, cin, cout), jnp.float32) * jnp.sqrt(2.0 / fan_in)
        b = jnp.zeros((cout,), jnp.float32)
        params.append((w, b))
    return params


# ----------------------------------------------------------------------------
# Pure-JAX references for the numerics sanity check
# ----------------------------------------------------------------------------
def _conv_ref(x_hnwc, w, b, relu):
    xn = jnp.transpose(x_hnwc, (1, 0, 2, 3)).astype(jnp.float32)   # (N,H,W,C)
    wq = w.astype(jnp.bfloat16).astype(jnp.float32)                # same quantized weights
    out = jax.lax.conv_general_dilated(
        xn, wq, window_strides=(1, 1), padding="SAME",
        dimension_numbers=("NHWC", "HWIO", "NHWC"),
        precision=jax.lax.Precision.HIGHEST)
    out = out + b.reshape(1, 1, 1, -1)
    if relu:
        out = jnp.maximum(out, 0.0)
    return jnp.transpose(out, (1, 0, 2, 3))                        # back to (H,N,W,C)


def _pool_ref(x_hnwc, relu):
    x = x_hnwc.astype(jnp.float32)
    H, N, W, C = x.shape
    x = x.reshape(H // 2, 2, N, W // 2, 2, C)
    m = x.max(axis=(1, 4))
    if relu:
        m = jnp.maximum(m, 0.0)
    return m


if __name__ == "__main__":
    key = jax.random.PRNGKey(0)
    kx, kp, kt = jax.random.split(key, 3)

    # --- numerics sanity check: one conv + one pool vs XLA reference (bf16 tolerance) ---
    xt = jax.random.normal(kt, (8, 2, 8, 16), jnp.float32).astype(jnp.bfloat16)   # (H,N,W,C)
    kw_, kb_ = jax.random.split(kt)
    wt = jax.random.normal(kw_, (3, 3, 16, 32), jnp.float32) * 0.2
    bt = jax.random.normal(kb_, (32,), jnp.float32) * 0.1

    got = conv3x3(xt, wt.astype(jnp.bfloat16).reshape(9, 16, 32),
                  bt.reshape(1, 32), relu=True).astype(jnp.float32)
    want = _conv_ref(xt, wt, bt, relu=True)
    rel = jnp.max(jnp.abs(got - want) / (1.0 + jnp.abs(want)))
    assert float(rel) < 0.03, float(rel)

    got_p = maxpool2x2(xt, relu=True).astype(jnp.float32)
    want_p = _pool_ref(xt, relu=True)
    assert float(jnp.max(jnp.abs(got_p - want_p))) < 0.02

    # --- full VGG16-features forward (3-channel 32x32 so 5 pools leave a 1x1 map) ---
    x = jax.random.normal(kx, (2, 3, 32, 32), jnp.float32)
    params = init_params(kp)
    feats, out = vgg_forward(x, params)
    jax.block_until_ready(out)
    for f in feats.values():
        jax.block_until_ready(f)

    # reconstruct the PyTorch-style returnVector ordering
    returnVector = [(name, feats[name]) for name in TAP_ORDER]
    expected = {"conv1": (2, 64, 32, 32), "conv2": (2, 128, 16, 16),
                "conv3": (2, 256, 8, 8), "conv4": (2, 512, 4, 4),
                "conv5": (2, 512, 2, 2)}
    assert out.shape == (2, 512, 1, 1)
    for name, f in returnVector:
        assert f.shape == expected[name], (name, f.shape)

    print("KERNEL_OK")
</pallas_src>

<mosaic_0001>
module attributes {stable_mosaic.version = 11 : i64} {
  func.func @_conv3x3_row_kernel(%arg0: i32, %arg1: memref<1x2x10x16xbf16, #tpu.memory_space<vmem>>, %arg2: memref<1x2x10x16xbf16, #tpu.memory_space<vmem>>, %arg3: memref<1x2x10x16xbf16, #tpu.memory_space<vmem>>, %arg4: memref<9x16x32xbf16, #tpu.memory_space<vmem>>, %arg5: memref<1x32xf32, #tpu.memory_space<vmem>>, %arg6: memref<1x2x8x32xbf16, #tpu.memory_space<vmem>>) attributes {dimension_semantics = [#tpu.dimension_semantics<parallel>], iteration_bounds = array<i64: 8>, scalar_prefetch = 0 : i64, scratch_operands = 0 : i64, tpu.core_type = #tpu.core_type<tc>, window_params = [{transform_indices = @transform_0, window_bounds = array<i64: 1, 2, 10, 16>}, {transform_indices = @transform_1, window_bounds = array<i64: 1, 2, 10, 16>}, {transform_indices = @transform_2, window_bounds = array<i64: 1, 2, 10, 16>}, {pipeline_mode = #tpu.pipeline_mode<synchronous>, transform_indices = @transform_3, window_bounds = array<i64: 9, 16, 32>}, {pipeline_mode = #tpu.pipeline_mode<synchronous>, transform_indices = @transform_4, window_bounds = array<i64: 1, 32>}, {transform_indices = @transform_5, window_bounds = array<i64: 1, 2, 8, 32>}]} {
    %c0 = arith.constant 0 : index
    %c0_0 = arith.constant 0 : index
    %c0_1 = arith.constant 0 : index
    %c0_2 = arith.constant 0 : index
    %0 = vector.load %arg1[%c0, %c0_0, %c0_1, %c0_2] : memref<1x2x10x16xbf16, #tpu.memory_space<vmem>>, vector<1x2x10x16xbf16>
    %1 = vector.shape_cast %0 : vector<1x2x10x16xbf16> to vector<2x10x16xbf16>
    %2 = vector.extract_strided_slice %1 {offsets = [0, 0, 0], sizes = [2, 8, 16], strides = [1, 1, 1]} : vector<2x10x16xbf16> to vector<2x8x16xbf16>
    %3 = vector.shape_cast %2 : vector<2x8x16xbf16> to vector<16x16xbf16>
    %c0_3 = arith.constant 0 : index
    %c0_4 = arith.constant 0 : index
    %c0_5 = arith.constant 0 : index
    %4 = vector.load %arg4[%c0_3, %c0_4, %c0_5] : memref<9x16x32xbf16, #tpu.memory_space<vmem>>, vector<1x16x32xbf16>
    %5 = vector.shape_cast %4 : vector<1x16x32xbf16> to vector<16x32xbf16>
    %cst = arith.constant dense<0.000000e+00> : vector<16x32xf32>
    %6 = tpu.matmul %3, %5, %cst {dimension_numbers = #tpu.dot_dimension_numbers<[1], [0], [0], [1], [0, 0, 1, 1], [], []>} : vector<16x16xbf16>, vector<16x32xbf16>, vector<16x32xf32> -> vector<16x32xf32>
    %7 = vector.extract_strided_slice %1 {offsets = [0, 1, 0], sizes = [2, 8, 16], strides = [1, 1, 1]} : vector<2x10x16xbf16> to vector<2x8x16xbf16>
    %8 = vector.shape_cast %7 : vector<2x8x16xbf16> to vector<16x16xbf16>
    %c1 = arith.constant 1 : index
    %c0_6 = arith.constant 0 : index
    %c0_7 = arith.constant 0 : index
    %9 = vector.load %arg4[%c1, %c0_6, %c0_7] : memref<9x16x32xbf16, #tpu.memory_space<vmem>>, vector<1x16x32xbf16>
    %10 = vector.shape_cast %9 : vector<1x16x32xbf16> to vector<16x32xbf16>
    %cst_8 = arith.constant dense<0.000000e+00> : vector<16x32xf32>
    %11 = tpu.matmul %8, %10, %cst_8 {dimension_numbers = #tpu.dot_dimension_numbers<[1], [0], [0], [1], [0, 0, 1, 1], [], []>} : vector<16x16xbf16>, vector<16x32xbf16>, vector<16x32xf32> -> vector<16x32xf32>
    %12 = arith.addf %6, %11 : vector<16x32xf32>
    %13 = vector.extract_strided_slice %1 {offsets = [0, 2, 0], sizes = [2, 8, 16], strides = [1, 1, 1]} : vector<2x10x16xbf16> to vector<2x8x16xbf16>
    %14 = vector.shape_cast %13 : vector<2x8x16xbf16> to vector<16x16xbf16>
    %c2 = arith.constant 2 : index
    %c0_9 = arith.constant 0 : index
    %c0_10 = arith.constant 0 : index
    %15 = vector.load %arg4[%c2, %c0_9, %c0_10] : memref<9x16x32xbf16, #tpu.memory_space<vmem>>, vector<1x16x32xbf16>
    %16 = vector.shape_cast %15 : vector<1x16x32xbf16> to vector<16x32xbf16>
    %cst_11 = arith.constant dense<0.000000e+00> : vector<16x32xf32>
    %17 = tpu.matmul %14, %16, %cst_11 {dimension_numbers = #tpu.dot_dimension_numbers<[1], [0], [0], [1], [0, 0, 1, 1], [], []>} : vector<16x16xbf16>, vector<16x32xbf16>, vector<16x32xf32> -> vector<16x32xf32>
    %18 = arith.addf %12, %17 : vector<16x32xf32>
    %c0_12 = arith.constant 0 : index
    %c0_13 = arith.constant 0 : index
    %c0_14 = arith.constant 0 : index
    %c0_15 = arith.constant 0 : index
    %19 = vector.load %arg2[%c0_12, %c0_13, %c0_14, %c0_15] : memref<1x2x10x16xbf16, #tpu.memory_space<vmem>>, vector<1x2x10x16xbf16>
    %20 = vector.shape_cast %19 : vector<1x2x10x16xbf16> to vector<2x10x16xbf16>
    %21 = vector.extract_strided_slice %20 {offsets = [0, 0, 0], sizes = [2, 8, 16], strides = [1, 1, 1]} : vector<2x10x16xbf16> to vector<2x8x16xbf16>
    %22 = vector.shape_cast %21 : vector<2x8x16xbf16> to vector<16x16xbf16>
    %c3 = arith.constant 3 : index
    %c0_16 = arith.constant 0 : index
    %c0_17 = arith.constant 0 : index
    %23 = vector.load %arg4[%c3, %c0_16, %c0_17] : memref<9x16x32xbf16, #tpu.memory_space<vmem>>, vector<1x16x32xbf16>
    %24 = vector.shape_cast %23 : vector<1x16x32xbf16> to vector<16x32xbf16>
    %cst_18 = arith.constant dense<0.000000e+00> : vector<16x32xf32>
    %25 = tpu.matmul %22, %24, %cst_18 {dimension_numbers = #tpu.dot_dimension_numbers<[1], [0], [0], [1], [0, 0, 1, 1], [], []>} : vector<16x16xbf16>, vector<16x32xbf16>, vector<16x32xf32> -> vector<16x32xf32>
    %26 = arith.addf %18, %25 : vector<16x32xf32>
    %27 = vector.extract_strided_slice %20 {offsets = [0, 1, 0], sizes = [2, 8, 16], strides = [1, 1, 1]} : vector<2x10x16xbf16> to vector<2x8x16xbf16>
    %28 = vector.shape_cast %27 : vector<2x8x16xbf16> to vector<16x16xbf16>
    %c4 = arith.constant 4 : index
    %c0_19 = arith.constant 0 : index
    %c0_20 = arith.constant 0 : index
    %29 = vector.load %arg4[%c4, %c0_19, %c0_20] : memref<9x16x32xbf16, #tpu.memory_space<vmem>>, vector<1x16x32xbf16>
    %30 = vector.shape_cast %29 : vector<1x16x32xbf16> to vector<16x32xbf16>
    %cst_21 = arith.constant dense<0.000000e+00> : vector<16x32xf32>
    %31 = tpu.matmul %28, %30, %cst_21 {dimension_numbers = #tpu.dot_dimension_numbers<[1], [0], [0], [1], [0, 0, 1, 1], [], []>} : vector<16x16xbf16>, vector<16x32xbf16>, vector<16x32xf32> -> vector<16x32xf32>
    %32 = arith.addf %26, %31 : vector<16x32xf32>
    %33 = vector.extract_strided_slice %20 {offsets = [0, 2, 0], sizes = [2, 8, 16], strides = [1, 1, 1]} : vector<2x10x16xbf16> to vector<2x8x16xbf16>
    %34 = vector.shape_cast %33 : vector<2x8x16xbf16> to vector<16x16xbf16>
    %c5 = arith.constant 5 : index
    %c0_22 = arith.constant 0 : index
    %c0_23 = arith.constant 0 : index
    %35 = vector.load %arg4[%c5, %c0_22, %c0_23] : memref<9x16x32xbf16, #tpu.memory_space<vmem>>, vector<1x16x32xbf16>
    %36 = vector.shape_cast %35 : vector<1x16x32xbf16> to vector<16x32xbf16>
    %cst_24 = arith.constant dense<0.000000e+00> : vector<16x32xf32>
    %37 = tpu.matmul %34, %36, %cst_24 {dimension_numbers = #tpu.dot_dimension_numbers<[1], [0], [0], [1], [0, 0, 1, 1], [], []>} : vector<16x16xbf16>, vector<16x32xbf16>, vector<16x32xf32> -> vector<16x32xf32>
    %38 = arith.addf %32, %37 : vector<16x32xf32>
    %c0_25 = arith.constant 0 : index
    %c0_26 = arith.constant 0 : index
    %c0_27 = arith.constant 0 : index
    %c0_28 = arith.constant 0 : index
    %39 = vector.load %arg3[%c0_25, %c0_26, %c0_27, %c0_28] : memref<1x2x10x16xbf16, #tpu.memory_space<vmem>>, vector<1x2x10x16xbf16>
    %40 = vector.shape_cast %39 : vector<1x2x10x16xbf16> to vector<2x10x16xbf16>
    %41 = vector.extract_strided_slice %40 {offsets = [0, 0, 0], sizes = [2, 8, 16], strides = [1, 1, 1]} : vector<2x10x16xbf16> to vector<2x8x16xbf16>
    %42 = vector.shape_cast %41 : vector<2x8x16xbf16> to vector<16x16xbf16>
    %c6 = arith.constant 6 : index
    %c0_29 = arith.constant 0 : index
    %c0_30 = arith.constant 0 : index
    %43 = vector.load %arg4[%c6, %c0_29, %c0_30] : memref<9x16x32xbf16, #tpu.memory_space<vmem>>, vector<1x16x32xbf16>
    %44 = vector.shape_cast %43 : vector<1x16x32xbf16> to vector<16x32xbf16>
    %cst_31 = arith.constant dense<0.000000e+00> : vector<16x32xf32>
    %45 = tpu.matmul %42, %44, %cst_31 {dimension_numbers = #tpu.dot_dimension_numbers<[1], [0], [0], [1], [0, 0, 1, 1], [], []>} : vector<16x16xbf16>, vector<16x32xbf16>, vector<16x32xf32> -> vector<16x32xf32>
    %46 = arith.addf %38, %45 : vector<16x32xf32>
    %47 = vector.extract_strided_slice %40 {offsets = [0, 1, 0], sizes = [2, 8, 16], strides = [1, 1, 1]} : vector<2x10x16xbf16> to vector<2x8x16xbf16>
    %48 = vector.shape_cast %47 : vector<2x8x16xbf16> to vector<16x16xbf16>
    %c7 = arith.constant 7 : index
    %c0_32 = arith.constant 0 : index
    %c0_33 = arith.constant 0 : index
    %49 = vector.load %arg4[%c7, %c0_32, %c0_33] : memref<9x16x32xbf16, #tpu.memory_space<vmem>>, vector<1x16x32xbf16>
    %50 = vector.shape_cast %49 : vector<1x16x32xbf16> to vector<16x32xbf16>
    %cst_34 = arith.constant dense<0.000000e+00> : vector<16x32xf32>
    %51 = tpu.matmul %48, %50, %cst_34 {dimension_numbers = #tpu.dot_dimension_numbers<[1], [0], [0], [1], [0, 0, 1, 1], [], []>} : vector<16x16xbf16>, vector<16x32xbf16>, vector<16x32xf32> -> vector<16x32xf32>
    %52 = arith.addf %46, %51 : vector<16x32xf32>
    %53 = vector.extract_strided_slice %40 {offsets = [0, 2, 0], sizes = [2, 8, 16], strides = [1, 1, 1]} : vector<2x10x16xbf16> to vector<2x8x16xbf16>
    %54 = vector.shape_cast %53 : vector<2x8x16xbf16> to vector<16x16xbf16>
    %c8 = arith.constant 8 : index
    %c0_35 = arith.constant 0 : index
    %c0_36 = arith.constant 0 : index
    %55 = vector.load %arg4[%c8, %c0_35, %c0_36] : memref<9x16x32xbf16, #tpu.memory_space<vmem>>, vector<1x16x32xbf16>
    %56 = vector.shape_cast %55 : vector<1x16x32xbf16> to vector<16x32xbf16>
    %cst_37 = arith.constant dense<0.000000e+00> : vector<16x32xf32>
    %57 = tpu.matmul %54, %56, %cst_37 {dimension_numbers = #tpu.dot_dimension_numbers<[1], [0], [0], [1], [0, 0, 1, 1], [], []>} : vector<16x16xbf16>, vector<16x32xbf16>, vector<16x32xf32> -> vector<16x32xf32>
    %58 = arith.addf %52, %57 : vector<16x32xf32>
    %c0_38 = arith.constant 0 : index
    %c0_39 = arith.constant 0 : index
    %59 = vector.load %arg5[%c0_38, %c0_39] : memref<1x32xf32, #tpu.memory_space<vmem>>, vector<1x32xf32>
    %60 = vector.broadcast %59 : vector<1x32xf32> to vector<16x32xf32>
    %61 = arith.addf %58, %60 : vector<16x32xf32>
    %cst_40 = arith.constant 0.000000e+00 : f32
    %62 = vector.broadcast %cst_40 : f32 to vector<16x32xf32>
    %63 = arith.maximumf %61, %62 : vector<16x32xf32>
    %64 = vector.shape_cast %63 : vector<16x32xf32> to vector<1x2x8x32xf32>
    %65 = arith.truncf %64 : vector<1x2x8x32xf32> to vector<1x2x8x32xbf16>
    %c0_41 = arith.constant 0 : index
    %c0_42 = arith.constant 0 : index
    %c0_43 = arith.constant 0 : index
    %c0_44 = arith.constant 0 : index
    %66 = vector.load %arg6[%c0_41, %c0_42, %c0_43, %c0_44] : memref<1x2x8x32xbf16, #tpu.memory_space<vmem>>, vector<1x2x8x32xbf16>
    tpu.vector_store %arg6[%c0_41, %c0_42, %c0_43, %c0_44], %65 {strides = array<i32>} : memref<1x2x8x32xbf16, #tpu.memory_space<vmem>>, vector<1x2x8x32xbf16>,
    return
  }
  func.func @transform_0(%arg0: i32) -> (i32, i32, i32, i32) {
    %c0_i32 = arith.constant 0 : i32
    %0 = arith.addi %arg0, %c0_i32 : i32
    %c0_i32_0 = arith.constant 0 : i32
    %c0_i32_1 = arith.constant 0 : i32
    %c0_i32_2 = arith.constant 0 : i32
    %c0_i32_3 = arith.constant 0 : i32
    return %0, %c0_i32_0, %c0_i32_1, %c0_i32_2 : i32, i32, i32, i32
  }
  func.func @transform_1(%arg0: i32) -> (i32, i32, i32, i32) {
    %c1_i32 = arith.constant 1 : i32
    %0 = arith.addi %arg0, %c1_i32 : i32
    %c0_i32 = arith.constant 0 : i32
    %c0_i32_0 = arith.constant 0 : i32
    %c0_i32_1 = arith.constant 0 : i32
    %c0_i32_2 = arith.constant 0 : i32
    return %0, %c0_i32, %c0_i32_0, %c0_i32_1 : i32, i32, i32, i32
  }
  func.func @transform_2(%arg0: i32) -> (i32, i32, i32, i32) {
    %c2_i32 = arith.constant 2 : i32
    %0 = arith.addi %arg0, %c2_i32 : i32
    %c0_i32 = arith.constant 0 : i32
    %c0_i32_0 = arith.constant 0 : i32
    %c0_i32_1 = arith.constant 0 : i32
    %c0_i32_2 = arith.constant 0 : i32
    return %0, %c0_i32, %c0_i32_0, %c0_i32_1 : i32, i32, i32, i32
  }
  func.func @transform_3(%arg0: i32) -> (i32, i32, i32) {
    %c0_i32 = arith.constant 0 : i32
    %c0_i32_0 = arith.constant 0 : i32
    %c0_i32_1 = arith.constant 0 : i32
    %c0_i32_2 = arith.constant 0 : i32
    return %c0_i32, %c0_i32_0, %c0_i32_1 : i32, i32, i32
  }
  func.func @transform_4(%arg0: i32) -> (i32, i32) {
    %c0_i32 = arith.constant 0 : i32
    %c0_i32_0 = arith.constant 0 : i32
    %c0_i32_1 = arith.constant 0 : i32
    return %c0_i32, %c0_i32_0 : i32, i32
  }
  func.func @transform_5(%arg0: i32) -> (i32, i32, i32, i32) {
    %c0_i32 = arith.constant 0 : i32
    %c0_i32_0 = arith.constant 0 : i32
    %c0_i32_1 = arith.constant 0 : i32
    %c0_i32_2 = arith.constant 0 : i32
    return %arg0, %c0_i32, %c0_i32_0, %c0_i32_1 : i32, i32, i32, i32
  }
}

</mosaic_0001>

<llo_original>
// kernel: tpu_custom_call.1
$region0: #{tpu_custom_call.1}
  #allocation0 [shape = 'u32[]', space=smem, size = 0x4, offset = 0x4, fixed_abs, tag = 'smem constant byte address 0x4 - core index']
  #allocation1 [shape = 'u32[144,128]{1,0:T(1,128)}', space=vmem, size = 0x12000, scoped, tag = 'internal scratch']
  %s0 = inlined_call_operand.vmem [shape: bf16[10,2,10,16], index: 0, kind: input, shape index: {}]
  %s1 = inlined_call_operand.vmem [shape: bf16[10,2,10,16], index: 1, kind: input, shape index: {}]
  %s2 = inlined_call_operand.vmem [shape: bf16[10,2,10,16], index: 2, kind: input, shape index: {}]
  %s3 = inlined_call_operand.vmem [shape: bf16[9,16,32], index: 3, kind: input, shape index: {}]
  %s4 = inlined_call_operand.vmem [shape: f32[1,32], index: 4, kind: input, shape index: {}]
  %s5 = inlined_call_operand.hbm [shape: bf16[8,2,8,32], index: 5, kind: output, shape index: {}]
  %s6 = sld [smem:[#allocation0]]
  $region53: #{tpu_custom_call.1} parent=0
    _
  %s8 = ssub.s32 1, %s6
  %s9 = scalar_select 0, %s8, %s6
  $region1: #{tpu_custom_call.1} parent=0
    #allocation2 [shape = 'u8[8192]{0}', space=vmem, size = 0x2000, scoped, tag = 'output window, operand 0']
    #allocation3 [shape = 's32[2]{0}', space=sflag, size = 0x8, scoped, tag = 'scoped memory for tpu_custom_call.1']
    %10 = vsyncpa [#allocation3], 0
    %s11 = scalar_lea.sflag [#allocation3], 1
    %12 = vsyncpa %s11, 0
    loop: start=0, step=1, limit=10
    $region2: #{tpu_custom_call.1} parent=1 // loop_pre_header
      _
    $region3: #{tpu_custom_call.1} parent=1 // loop_header
      %s14 = sphi 0, %s18
      %p15 = scmp.ge.s32.totalorder %s14, 10
      %s24 = sphi 0, %s26
      %s27 = sphi 0, %s24
      %s28 = sphi 0, %s27
      %s44 = sphi 0, %s28
      %s52 = sphi 0, %s54
      %s55 = sphi 0, %s52
      %s56 = sphi 0, %s55
      %s72 = sphi 0, %s56
      %s80 = sphi 0, %s82
      %s83 = sphi 0, %s80
      %s84 = sphi 0, %s83
      %s100 = sphi 0, %s84
      %s104 = sphi 0, %s104
      %s106 = sphi 0, %s104
      %s107 = sphi 0, %s106
      %s121 = sphi 0, %s107
      %s125 = sphi 0, %s125
      %s127 = sphi 0, %s125
      %s128 = sphi 0, %s127
      %s142 = sphi 0, %s128
      %s148 = sphi 0, %s150
      %s151 = sphi 0, %s148
      %s152 = sphi 0, %s151
      %s168 = sphi 0, %s152
    $region4: #{tpu_custom_call.1} parent=1 // loop_header_branch
      %17 = sbr.rel (%p15) target = $region8
    $region5: #{tpu_custom_call.1} parent=1 // loop_body
      %s19 = ssub.s32 %s14, 1
      %s20 = ssub.s32 %s14, 2
      %s21 = sadd.s32 %s14, 1
      %s22 = ssub.s32 %s14, %s21
      %p23 = scmp.eq.s32.totalorder %s22, 0
      %s25 = sadd.s32 %s24, 1
      %s26 = scalar_select %p23, %s24, %s25
      %p29 = pneg %p23
      %p30 = scmp.eq.s32.totalorder %s14, 7
      %p31 = por %p29, %p30
      %p32 = scmp.ne.s32.totalorder %s24, %s27
      %p33 = scmp.eq.s32.totalorder %s14, 0
      %p34 = por %p32, %p33
      %p35 = scmp.ne.s32.totalorder %s24, %s27
      %p36 = scmp.eq.s32.totalorder %s19, 7
      %p37 = por %p35, %p36
      %p38 = scmp.ne.s32.totalorder %s27, %s28
      %p39 = scmp.eq.s32.totalorder %s19, 0
      %p40 = por %p38, %p39
      %p41 = scmp.ne.s32.totalorder %s27, %s28
      %p42 = scmp.eq.s32.totalorder %s20, 7
      %p43 = por %p41, %p42
      %p45 = scmp.ne.s32.totalorder %s28, %s44
      %p46 = scmp.eq.s32.totalorder %s20, 0
      %p47 = por %p45, %p46
      %s48 = sadd.s32 %s14, 1
      %s49 = sadd.s32 %s21, 1
      %s50 = ssub.s32 %s48, %s49
      %p51 = scmp.eq.s32.totalorder %s50, 0
      %s53 = sadd.s32 %s52, 1
      %s54 = scalar_select %p51, %s52, %s53
      %p57 = pneg %p51
      %p58 = scmp.eq.s32.totalorder %s14, 7
      %p59 = por %p57, %p58
      %p60 = scmp.ne.s32.totalorder %s52, %s55
      %p61 = scmp.eq.s32.totalorder %s14, 0
      %p62 = por %p60, %p61
      %p63 = scmp.ne.s32.totalorder %s52, %s55
      %p64 = scmp.eq.s32.totalorder %s19, 7
      %p65 = por %p63, %p64
      %p66 = scmp.ne.s32.totalorder %s55, %s56
      %p67 = scmp.eq.s32.totalorder %s19, 0
      %p68 = por %p66, %p67
      %p69 = scmp.ne.s32.totalorder %s55, %s56
      %p70 = scmp.eq.s32.totalorder %s20, 7
      %p71 = por %p69, %p70
      %p73 = scmp.ne.s32.totalorder %s56, %s72
      %p74 = scmp.eq.s32.totalorder %s20, 0
      %p75 = por %p73, %p74
      %s76 = sadd.s32 %s14, 2
      %s77 = sadd.s32 %s21, 2
      %s78 = ssub.s32 %s76, %s77
      %p79 = scmp.eq.s32.totalorder %s78, 0
      %s81 = sadd.s32 %s80, 1
      %s82 = scalar_select %p79, %s80, %s81
      %p85 = pneg %p79
      %p86 = scmp.eq.s32.totalorder %s14, 7
      %p87 = por %p85, %p86
      %p88 = scmp.ne.s32.totalorder %s80, %s83
      %p89 = scmp.eq.s32.totalorder %s14, 0
      %p90 = por %p88, %p89
      %p91 = scmp.ne.s32.totalorder %s80, %s83
      %p92 = scmp.eq.s32.totalorder %s19, 7
      %p93 = por %p91, %p92
      %p94 = scmp.ne.s32.totalorder %s83, %s84
      %p95 = scmp.eq.s32.totalorder %s19, 0
      %p96 = por %p94, %p95
      %p97 = scmp.ne.s32.totalorder %s83, %s84
      %p98 = scmp.eq.s32.totalorder %s20, 7
      %p99 = por %p97, %p98
      %p101 = scmp.ne.s32.totalorder %s84, %s100
      %p102 = scmp.eq.s32.totalorder %s20, 0
      %p103 = por %p101, %p102
      %s105 = sadd.s32 %s104, 1
      %p108 = scmp.eq.s32.totalorder %s14, 7
      %p109 = scmp.ne.s32.totalorder %s104, %s106
      %p110 = scmp.eq.s32.totalorder %s14, 0
      %p111 = por %p109, %p110
      %p112 = scmp.ne.s32.totalorder %s104, %s106
      %p113 = scmp.eq.s32.totalorder %s19, 7
      %p114 = por %p112, %p113
      %p115 = scmp.ne.s32.totalorder %s106, %s107
      %p116 = scmp.eq.s32.totalorder %s19, 0
      %p117 = por %p115, %p116
      %p118 = scmp.ne.s32.totalorder %s106, %s107
      %p119 = scmp.eq.s32.totalorder %s20, 7
      %p120 = por %p118, %p119
      %p122 = scmp.ne.s32.totalorder %s107, %s121
      %p123 = scmp.eq.s32.totalorder %s20, 0
      %p124 = por %p122, %p123
      %s126 = sadd.s32 %s125, 1
      %p129 = scmp.eq.s32.totalorder %s14, 7
      %p130 = scmp.ne.s32.totalorder %s125, %s127
      %p131 = scmp.eq.s32.totalorder %s14, 0
      %p132 = por %p130, %p131
      %p133 = scmp.ne.s32.totalorder %s125, %s127
      %p134 = scmp.eq.s32.totalorder %s19, 7
      %p135 = por %p133, %p134
      %p136 = scmp.ne.s32.totalorder %s127, %s128
      %p137 = scmp.eq.s32.totalorder %s19, 0
      %p138 = por %p136, %p137
      %p139 = scmp.ne.s32.totalorder %s127, %s128
      %p140 = scmp.eq.s32.totalorder %s20, 7
      %p141 = por %p139, %p140
      %p143 = scmp.ne.s32.totalorder %s128, %s142
      %p144 = scmp.eq.s32.totalorder %s20, 0
      %p145 = por %p143, %p144
      %s146 = ssub.s32 %s14, %s21
      %p147 = scmp.eq.s32.totalorder %s146, 0
      %s149 = sadd.s32 %s148, 1
      %s150 = scalar_select %p147, %s148, %s149
      %p153 = pneg %p147
      %p154 = scmp.eq.s32.totalorder %s14, 7
      %p155 = por %p153, %p154
      %p156 = scmp.ne.s32.totalorder %s148, %s151
      %p157 = scmp.eq.s32.totalorder %s14, 0
      %p158 = por %p156, %p157
      %p159 = scmp.ne.s32.totalorder %s148, %s151
      %p160 = scmp.eq.s32.totalorder %s19, 7
      %p161 = por %p159, %p160
      %p162 = scmp.ne.s32.totalorder %s151, %s152
      %p163 = scmp.eq.s32.totalorder %s19, 0
      %p164 = por %p162, %p163
      %p165 = scmp.ne.s32.totalorder %s151, %s152
      %p166 = scmp.eq.s32.totalorder %s20, 7
      %p167 = por %p165, %p166
      %p169 = scmp.ne.s32.totalorder %s152, %s168
      %p170 = scmp.eq.s32.totalorder %s20, 0
      %p171 = por %p169, %p170
      %p172 = scmp.le.s32.totalorder 1, %s14
      %p173 = scmp.lt.s32.totalorder %s14, 9
      %p174 = pnand %p172, %p173
      %p175 = pneg %p174
      // Predicated region
      $region9: #{tpu_custom_call.1} parent=5 // pred_check
        _
      $region10: #{tpu_custom_call.1} parent=5 // pred_check_branch
        %177 = sbr.rel (%p174) target = $region12
      $region11: #{tpu_custom_call.1} parent=5 // pred_region
        %s178 = ssub.s32 %s14, 1
        // Predicated region
        $region13: #{tpu_custom_call.1} parent=11 // pred_check
          %p179 = pneg %p117
        $region14: #{tpu_custom_call.1} parent=11 // pred_check_branch
          %181 = sbr.rel (%p179) target = $region16
        $region15: #{tpu_custom_call.1} parent=11 // pred_region
          _
        $region16: #{tpu_custom_call.1} parent=11 // pred_fallthru
          _
        // Predicated region
        $region17: #{tpu_custom_call.1} parent=11 // pred_check
          %p182 = pneg %p138
        $region18: #{tpu_custom_call.1} parent=11 // pred_check_branch
          %184 = sbr.rel (%p182) target = $region20
        $region19: #{tpu_custom_call.1} parent=11 // pred_region
          _
        $region20: #{tpu_custom_call.1} parent=11 // pred_fallthru
          _
      $region12: #{tpu_custom_call.1} parent=5 // pred_fallthru
        _
      %p185 = scmp.lt.s32.totalorder %s14, 8
      // Predicated region
      $region21: #{tpu_custom_call.1} parent=5 // pred_check
        %p186 = pneg %p185
      $region22: #{tpu_custom_call.1} parent=5 // pred_check_branch
        %188 = sbr.rel (%p186) target = $region24
      $region23: #{tpu_custom_call.1} parent=5 // pred_region
        // Predicated region
        $region25: #{tpu_custom_call.1} parent=23 // pred_check
          %p189 = pneg %p34
        $region26: #{tpu_custom_call.1} parent=23 // pred_check_branch
          %191 = sbr.rel (%p189) target = $region28
        $region27: #{tpu_custom_call.1} parent=23 // pred_region
          %p192 = scmp.lt.s32.totalorder %s14, 9
          %s193 = scalar_select %p192, %s14, 9
          %s194 = smul.addr %s193, 4
          %s195 = smul.addr %s194, 4
          %s196 = scalar_lea.vmem %s0, %s195
        $region28: #{tpu_custom_call.1} parent=23 // pred_fallthru
          _
        // Predicated region
        $region29: #{tpu_custom_call.1} parent=23 // pred_check
          %p197 = pneg %p62
        $region30: #{tpu_custom_call.1} parent=23 // pred_check_branch
          %199 = sbr.rel (%p197) target = $region32
        $region31: #{tpu_custom_call.1} parent=23 // pred_region
          %s200 = sadd.s32 %s14, 1
          %p201 = scmp.lt.s32.totalorder %s200, 9
          %s202 = scalar_select %p201, %s200, 9
          %s203 = smul.addr %s202, 4
          %s204 = smul.addr %s203, 4
          %s205 = scalar_lea.vmem %s1, %s204
          %s206 = sadd.s32 %s14, 1
        $region32: #{tpu_custom_call.1} parent=23 // pred_fallthru
          _
        // Predicated region
        $region33: #{tpu_custom_call.1} parent=23 // pred_check
          %p207 = pneg %p90
        $region34: #{tpu_custom_call.1} parent=23 // pred_check_branch
          %209 = sbr.rel (%p207) target = $region36
        $region35: #{tpu_custom_call.1} parent=23 // pred_region
          %s210 = sadd.s32 %s14, 2
          %p211 = scmp.lt.s32.totalorder %s210, 9
          %s212 = scalar_select %p211, %s210, 9
          %s213 = smul.addr %s212, 4
          %s214 = smul.addr %s213, 4
          %s215 = scalar_lea.vmem %s2, %s214
          %s216 = sadd.s32 %s14, 2
        $region36: #{tpu_custom_call.1} parent=23 // pred_fallthru
          _
      $region24: #{tpu_custom_call.1} parent=5 // pred_fallthru
        _
      %p217 = scmp.le.s32.totalorder 1, %s14
      %p218 = scmp.lt.s32.totalorder %s14, 9
      %p219 = pnand %p217, %p218
      %p220 = pneg %p219
      // Predicated region
      $region37: #{tpu_custom_call.1} parent=5 // pred_check
        _
      $region38: #{tpu_custom_call.1} parent=5 // pred_check_branch
        %222 = sbr.rel (%p219) target = $region40
      $region39: #{tpu_custom_call.1} parent=5 // pred_region
        %s223 = ssub.s32 %s14, 1
        %p224 = scmp.lt.s32.totalorder %s19, 9
        %s225 = scalar_select %p224, %s19, 9
        %s226 = smul.addr %s225, 4
        %s227 = smul.addr %s226, 4
        %s228 = scalar_lea.vmem %s0, %s227
        %p229 = pneg %p40
        %p230 = pneg %p37
        %s231 = sadd.s32 %s19, 1
        %p232 = scmp.lt.s32.totalorder %s231, 9
        %s233 = scalar_select %p232, %s231, 9
        %s234 = smul.addr %s233, 4
        %s235 = smul.addr %s234, 4
        %s236 = scalar_lea.vmem %s1, %s235
        %p237 = pneg %p68
        %p238 = pneg %p65
        %s239 = sadd.s32 %s19, 2
        %p240 = scmp.lt.s32.totalorder %s239, 9
        %s241 = scalar_select %p240, %s239, 9
        %s242 = smul.addr %s241, 4
        %s243 = smul.addr %s242, 4
        %s244 = scalar_lea.vmem %s2, %s243
        %p245 = pneg %p96
        %p246 = pneg %p93
        %p247 = pneg %p117
        %p248 = pneg %p114
        %p249 = pneg %p138
        %p250 = pneg %p135
        %p251 = pneg %p164
        %p252 = pneg %p161
        %s253 = sand.u32 %s151, 1
        %s254 = scalar_lea.sflag [#allocation3], %s253
        %s255 = sand.u32 %s151, 1
        %s256 = smul.addr %s255, 8
        %s257 = scalar_lea.vmem [#allocation2], %s256
        %p258 = scmp.lt.s32.totalorder %s19, 9
        %s259 = scalar_select %p258, %s19, 9
        %s260 = smul.addr %s259, 4
        %s261 = smul.addr %s260, 4
        %s262 = scalar_lea.vmem %s0, %s261
        %s263 = sadd.s32 %s19, 1
        %p264 = scmp.lt.s32.totalorder %s263, 9
        %s265 = scalar_select %p264, %s263, 9
        %s266 = smul.addr %s265, 4
        %s267 = smul.addr %s266, 4
        %s268 = scalar_lea.vmem %s1, %s267
        %s269 = sadd.s32 %s19, 1
        %s270 = sadd.s32 %s19, 2
        %p271 = scmp.lt.s32.totalorder %s270, 9
        %s272 = scalar_select %p271, %s270, 9
        %s273 = smul.addr %s272, 4
        %s274 = smul.addr %s273, 4
        %s275 = scalar_lea.vmem %s2, %s274
        %s276 = sadd.s32 %s19, 2
        %v278 = vld [vmem:[%s262] sm:$0xf]
        %v279 = vld [vmem:[%s262 + $0x4] sm:$0x1]
        %v280 = vld [vmem:[%s262 + $0x8] sm:$0xf]
        %v281 = vld [vmem:[%s262 + $0xc] sm:$0x1]
        %v282 = vld [vmem:[%s3] sm:$0xf]
        %v283 = vld [vmem:[%s3 + $0x4] sm:$0xf]
        %vm284 = vsmask.f32 3328
        %vm285 = vsmask.f32 7440
        %vm286 = vmor %vm284, %vm285
        %v288 = vshrl.u32 %v278, 16
        %v290 = vrot.slane %v288, 4
        %v291 = vshll.u32 %v278, 16
        %v293 = vrot.slane %v291, 5
        %v294 = vor.u32 %v290, %v293
        %v295 = vrot.slane %v294, 4
        %v297 = vshll.u32 %v279, 16
        %v299 = vrot.slane %v297, 5
        %v300 = vsel %vm286, %v295, %v299
        %v302 = vshrl.u32 %v280, 16
        %v304 = vrot.slane %v302, 4
        %v305 = vshll.u32 %v280, 16
        %v307 = vrot.slane %v305, 5
        %v308 = vor.u32 %v304, %v307
        %v309 = vrot.slane %v308, 4
        %v311 = vshll.u32 %v281, 16
        %v313 = vrot.slane %v311, 5
        %v314 = vsel %vm286, %v309, %v313
        %s315 = scalar_lea.vmem %s3, 8
        %v316 = vld [vmem:[%s315] sm:$0xf]
        %v317 = vld [vmem:[%s315 + $0x4] sm:$0xf]
        %v318 = vunpack.c.l.b16 %v300
        %v319 = vunpack.c.l.b16 %v314
        %v320 = vpack.c.b16 %v319, %v318
        %v323 = vunpack.c.l.b16 %v316
        %v324 = vunpack.c.l.b16 %v317
        %v325 = vpack.c.b16 %v324, %v323
        %vm327 = vcmask 130048
        %v329 = vsel %vm327, %v320, 0
        %331 = vmatprep.subr.bf16.mxu0 0
        %332 = vmatpush1.bf16.msra.mxu0 0
        %333 = vmatprep.subr.bf16.mxu0 0
        %334 = vmatpush1.bf16.msra.mxu0 0
        %335 = vmatprep.subr.bf16.mxu0 0
        %336 = vmatpush1.bf16.msra.mxu0 0
        %337 = vmatprep.subr.bf16.mxu0 0
        %338 = vmatpush1.bf16.msra.mxu0 0
        %339 = vmatprep.subr.bf16.mxu0 0
        %340 = vmatpush1.bf16.msra.mxu0 0
        %341 = vmatprep.subr.bf16.mxu0 0
        %342 = vmatpush1.bf16.msra.mxu0 0
        %343 = vmatprep.subr.bf16.mxu0 0
        %344 = vmatpush1.bf16.msra.mxu0 0
        %345 = vmatprep.subr.bf16.mxu0 0
        %346 = vmatpush1.bf16.msra.mxu0 %v325
        %347 = vmatprep.subr.bf16.mxu0 0
        %348 = vmatpush2.bf16.msra.mxu0 0
        %349 = vmatprep.subr.bf16.mxu0 0
        %350 = vmatpush2.bf16.msra.mxu0 0
        %351 = vmatprep.subr.bf16.mxu0 0
        %352 = vmatpush2.bf16.msra.mxu0 0
        %353 = vmatprep.subr.bf16.mxu0 0
        %354 = vmatpush2.bf16.msra.mxu0 0
        %355 = vmatprep.subr.bf16.mxu0 0
        %356 = vmatpush2.bf16.msra.mxu0 0
        %357 = vmatprep.subr.bf16.mxu0 0
        %358 = vmatpush2.bf16.msra.mxu0 0
        %359 = vmatprep.subr.bf16.mxu0 0
        %360 = vmatpush2.bf16.msra.mxu0 0
        %361 = vmatprep.subr.bf16.mxu0 0
        %362 = vmatpush2.bf16.msra.mxu0 0
        %363 = vmatprep.mubr.bf16.mxu0 0
        %364 = vmatmul.mubr.bf16.gmra.mxu0 %v329
        %v365 = vpop.f32.mrf.mxu0
        %v366 = vadd.f32 0.0, %v365
        %v367 = vpop.f32.mrf.mxu0
        %v368 = vpop.f32.mrf.mxu0
        %v369 = vadd.f32 0.0, %v368
        %v370 = vpop.f32.mrf.mxu0
        %371 = vdwg.mxu0
        %v374 = vunpack.c.l.b16 %v278
        %v375 = vunpack.c.l.b16 %v280
        %v376 = vpack.c.b16 %v375, %v374
        %v379 = vunpack.c.l.b16 %v282
        %v380 = vunpack.c.l.b16 %v283
        %v381 = vpack.c.b16 %v380, %v379
        %v384 = vsel %vm327, %v376, 0
        %386 = vmatprep.subr.bf16.mxu0 0
        %387 = vmatpush1.bf16.msra.mxu0 0
        %388 = vmatprep.subr.bf16.mxu0 0
        %389 = vmatpush1.bf16.msra.mxu0 0
        %390 = vmatprep.subr.bf16.mxu0 0
        %391 = vmatpush1.bf16.msra.mxu0 0
        %392 = vmatprep.subr.bf16.mxu0 0
        %393 = vmatpush1.bf16.msra.mxu0 0
        %394 = vmatprep.subr.bf16.mxu0 0
        %395 = vmatpush1.bf16.msra.mxu0 0
        %396 = vmatprep.subr.bf16.mxu0 0
        %397 = vmatpush1.bf16.msra.mxu0 0
        %398 = vmatprep.subr.bf16.mxu0 0
        %399 = vmatpush1.bf16.msra.mxu0 0
        %400 = vmatprep.subr.bf16.mxu0 0
        %401 = vmatpush1.bf16.msra.mxu0 %v381
        %402 = vmatprep.subr.bf16.mxu0 0
        %403 = vmatpush2.bf16.msra.mxu0 0
        %404 = vmatprep.subr.bf16.mxu0 0
        %405 = vmatpush2.bf16.msra.mxu0 0
        %406 = vmatprep.subr.bf16.mxu0 0
        %407 = vmatpush2.bf16.msra.mxu0 0
        %408 = vmatprep.subr.bf16.mxu0 0
        %409 = vmatpush2.bf16.msra.mxu0 0
        %410 = vmatprep.subr.bf16.mxu0 0
        %411 = vmatpush2.bf16.msra.mxu0 0
        %412 = vmatprep.subr.bf16.mxu0 0
        %413 = vmatpush2.bf16.msra.mxu0 0
        %414 = vmatprep.subr.bf16.mxu0 0
        %415 = vmatpush2.bf16.msra.mxu0 0
        %416 = vmatprep.subr.bf16.mxu0 0
        %417 = vmatpush2.bf16.msra.mxu0 0
        %418 = vmatprep.mubr.bf16.mxu0 0
        %419 = vmatmul.mubr.bf16.gmra.mxu0 %v384
        %v420 = vpop.f32.mrf.mxu0
        %v421 = vadd.f32 %v366, %v420
        %v422 = vpop.f32.mrf.mxu0
        %v423 = vpop.f32.mrf.mxu0
        %v424 = vadd.f32 %v369, %v423
        %v425 = vpop.f32.mrf.mxu0
        %426 = vdwg.mxu0
        %vm429 = vcmask 1042432
        %vm430 = vcmask 1046532
        %vm431 = vmor %vm429, %vm430
        %v432 = vrot.slane %v278, 5
        %v433 = vrot.slane %v432, 4
        %v434 = vrot.slane %v279, 5
        %v435 = vsel %vm431, %v433, %v434
        %v436 = vrot.slane %v280, 5
        %v437 = vrot.slane %v436, 4
        %v438 = vrot.slane %v281, 5
        %v439 = vsel %vm431, %v437, %v438
        %s440 = scalar_lea.vmem %s3, 16
        %v441 = vld [vmem:[%s440] sm:$0xf]
        %v442 = vld [vmem:[%s440 + $0x4] sm:$0xf]
        %v443 = vunpack.c.l.b16 %v435
        %v444 = vunpack.c.l.b16 %v439
        %v445 = vpack.c.b16 %v444, %v443
        %v448 = vunpack.c.l.b16 %v441
        %v449 = vunpack.c.l.b16 %v442
        %v450 = vpack.c.b16 %v449, %v448
        %v453 = vsel %vm327, %v445, 0
        %455 = vmatprep.subr.bf16.mxu0 0
        %456 = vmatpush1.bf16.msra.mxu0 0
        %457 = vmatprep.subr.bf16.mxu0 0
        %458 = vmatpush1.bf16.msra.mxu0 0
        %459 = vmatprep.subr.bf16.mxu0 0
        %460 = vmatpush1.bf16.msra.mxu0 0
        %461 = vmatprep.subr.bf16.mxu0 0
        %462 = vmatpush1.bf16.msra.mxu0 0
        %463 = vmatprep.subr.bf16.mxu0 0
        %464 = vmatpush1.bf16.msra.mxu0 0
        %465 = vmatprep.subr.bf16.mxu0 0
        %466 = vmatpush1.bf16.msra.mxu0 0
        %467 = vmatprep.subr.bf16.mxu0 0
        %468 = vmatpush1.bf16.msra.mxu0 0
        %469 = vmatprep.subr.bf16.mxu0 0
        %470 = vmatpush1.bf16.msra.mxu0 %v450
        %471 = vmatprep.subr.bf16.mxu0 0
        %472 = vmatpush2.bf16.msra.mxu0 0
        %473 = vmatprep.subr.bf16.mxu0 0
        %474 = vmatpush2.bf16.msra.mxu0 0
        %475 = vmatprep.subr.bf16.mxu0 0
        %476 = vmatpush2.bf16.msra.mxu0 0
        %477 = vmatprep.subr.bf16.mxu0 0
        %478 = vmatpush2.bf16.msra.mxu0 0
        %479 = vmatprep.subr.bf16.mxu0 0
        %480 = vmatpush2.bf16.msra.mxu0 0
        %481 = vmatprep.subr.bf16.mxu0 0
        %482 = vmatpush2.bf16.msra.mxu0 0
        %483 = vmatprep.subr.bf16.mxu0 0
        %484 = vmatpush2.bf16.msra.mxu0 0
        %485 = vmatprep.subr.bf16.mxu0 0
        %486 = vmatpush2.bf16.msra.mxu0 0
        %487 = vmatprep.mubr.bf16.mxu0 0
        %488 = vmatmul.mubr.bf16.gmra.mxu0 %v453
        %v489 = vpop.f32.mrf.mxu0
        %v490 = vadd.f32 0.0, %v489
        %v491 = vpop.f32.mrf.mxu0
        %v492 = vpop.f32.mrf.mxu0
        %v493 = vadd.f32 0.0, %v492
        %v494 = vpop.f32.mrf.mxu0
        %495 = vdwg.mxu0
        %v496 = vadd.f32 %v421, %v490
        %v497 = vadd.f32 %v424, %v493
        %v498 = vld [vmem:[%s268] sm:$0xf]
        %v499 = vld [vmem:[%s268 + $0x4] sm:$0x1]
        %v500 = vld [vmem:[%s268 + $0x8] sm:$0xf]
        %v501 = vld [vmem:[%s268 + $0xc] sm:$0x1]
        %s502 = scalar_lea.vmem %s3, 24
        %v503 = vld [vmem:[%s502] sm:$0xf]
        %v504 = vld [vmem:[%s502 + $0x4] sm:$0xf]
        %v507 = vunpack.c.l.b16 %v498
        %v508 = vunpack.c.l.b16 %v500
        %v509 = vpack.c.b16 %v508, %v507
        %v512 = vunpack.c.l.b16 %v503
        %v513 = vunpack.c.l.b16 %v504
        %v514 = vpack.c.b16 %v513, %v512
        %v517 = vsel %vm327, %v509, 0
        %519 = vmatprep.subr.bf16.mxu0 0
        %520 = vmatpush1.bf16.msra.mxu0 0
        %521 = vmatprep.subr.bf16.mxu0 0
        %522 = vmatpush1.bf16.msra.mxu0 0
        %523 = vmatprep.subr.bf16.mxu0 0
        %524 = vmatpush1.bf16.msra.mxu0 0
        %525 = vmatprep.subr.bf16.mxu0 0
        %526 = vmatpush1.bf16.msra.mxu0 0
        %527 = vmatprep.subr.bf16.mxu0 0
        %528 = vmatpush1.bf16.msra.mxu0 0
        %529 = vmatprep.subr.bf16.mxu0 0
        %530 = vmatpush1.bf16.msra.mxu0 0
        %531 = vmatprep.subr.bf16.mxu0 0
        %532 = vmatpush1.bf16.msra.mxu0 0
        %533 = vmatprep.subr.bf16.mxu0 0
        %534 = vmatpush1.bf16.msra.mxu0 %v514
        %535 = vmatprep.subr.bf16.mxu0 0
        %536 = vmatpush2.bf16.msra.mxu0 0
        %537 = vmatprep.subr.bf16.mxu0 0
        %538 = vmatpush2.bf16.msra.mxu0 0
        %539 = vmatprep.subr.bf16.mxu0 0
        %540 = vmatpush2.bf16.msra.mxu0 0
        %541 = vmatprep.subr.bf16.mxu0 0
        %542 = vmatpush2.bf16.msra.mxu0 0
        %543 = vmatprep.subr.bf16.mxu0 0
        %544 = vmatpush2.bf16.msra.mxu0 0
        %545 = vmatprep.subr.bf16.mxu0 0
        %546 = vmatpush2.bf16.msra.mxu0 0
        %547 = vmatprep.subr.bf16.mxu0 0
        %548 = vmatpush2.bf16.msra.mxu0 0
        %549 = vmatprep.subr.bf16.mxu0 0
        %550 = vmatpush2.bf16.msra.mxu0 0
        %551 = vmatprep.mubr.bf16.mxu0 0
        %552 = vmatmul.mubr.bf16.gmra.mxu0 %v517
        %v553 = vpop.f32.mrf.mxu0
        %v554 = vadd.f32 0.0, %v553
        %v555 = vpop.f32.mrf.mxu0
        %v556 = vpop.f32.mrf.mxu0
        %v557 = vadd.f32 0.0, %v556
        %v558 = vpop.f32.mrf.mxu0
        %559 = vdwg.mxu0
        %v560 = vadd.f32 %v496, %v554
        %v561 = vadd.f32 %v497, %v557
        %v563 = vshrl.u32 %v498, 16
        %v565 = vrot.slane %v563, 4
        %v566 = vshll.u32 %v498, 16
        %v568 = vrot.slane %v566, 5
        %v569 = vor.u32 %v565, %v568
        %v570 = vrot.slane %v569, 4
        %v572 = vshll.u32 %v499, 16
        %v574 = vrot.slane %v572, 5
        %v575 = vsel %vm286, %v570, %v574
        %v577 = vshrl.u32 %v500, 16
        %v579 = vrot.slane %v577, 4
        %v580 = vshll.u32 %v500, 16
        %v582 = vrot.slane %v580, 5
        %v583 = vor.u32 %v579, %v582
        %v584 = vrot.slane %v583, 4
        %v586 = vshll.u32 %v501, 16
        %v588 = vrot.slane %v586, 5
        %v589 = vsel %vm286, %v584, %v588
        %s590 = scalar_lea.vmem %s3, 32
        %v591 = vld [vmem:[%s590] sm:$0xf]
        %v592 = vld [vmem:[%s590 + $0x4] sm:$0xf]
        %v593 = vunpack.c.l.b16 %v575
        %v594 = vunpack.c.l.b16 %v589
        %v595 = vpack.c.b16 %v594, %v593
        %v598 = vunpack.c.l.b16 %v591
        %v599 = vunpack.c.l.b16 %v592
        %v600 = vpack.c.b16 %v599, %v598
        %v603 = vsel %vm327, %v595, 0
        %605 = vmatprep.subr.bf16.mxu0 0
        %606 = vmatpush1.bf16.msra.mxu0 0
        %607 = vmatprep.subr.bf16.mxu0 0
        %608 = vmatpush1.bf16.msra.mxu0 0
        %609 = vmatprep.subr.bf16.mxu0 0
        %610 = vmatpush1.bf16.msra.mxu0 0
        %611 = vmatprep.subr.bf16.mxu0 0
        %612 = vmatpush1.bf16.msra.mxu0 0
        %613 = vmatprep.subr.bf16.mxu0 0
        %614 = vmatpush1.bf16.msra.mxu0 0
        %615 = vmatprep.subr.bf16.mxu0 0
        %616 = vmatpush1.bf16.msra.mxu0 0
        %617 = vmatprep.subr.bf16.mxu0 0
        %618 = vmatpush1.bf16.msra.mxu0 0
        %619 = vmatprep.subr.bf16.mxu0 0
        %620 = vmatpush1.bf16.msra.mxu0 %v600
        %621 = vmatprep.subr.bf16.mxu0 0
        %622 = vmatpush2.bf16.msra.mxu0 0
        %623 = vmatprep.subr.bf16.mxu0 0
        %624 = vmatpush2.bf16.msra.mxu0 0
        %625 = vmatprep.subr.bf16.mxu0 0
        %626 = vmatpush2.bf16.msra.mxu0 0
        %627 = vmatprep.subr.bf16.mxu0 0
        %628 = vmatpush2.bf16.msra.mxu0 0
        %629 = vmatprep.subr.bf16.mxu0 0
        %630 = vmatpush2.bf16.msra.mxu0 0
        %631 = vmatprep.subr.bf16.mxu0 0
        %632 = vmatpush2.bf16.msra.mxu0 0
        %633 = vmatprep.subr.bf16.mxu0 0
        %634 = vmatpush2.bf16.msra.mxu0 0
        %635 = vmatprep.subr.bf16.mxu0 0
        %636 = vmatpush2.bf16.msra.mxu0 0
        %637 = vmatprep.mubr.bf16.mxu0 0
        %638 = vmatmul.mubr.bf16.gmra.mxu0 %v603
        %v639 = vpop.f32.mrf.mxu0
        %v640 = vadd.f32 0.0, %v639
        %v641 = vpop.f32.mrf.mxu0
        %v642 = vpop.f32.mrf.mxu0
        %v643 = vadd.f32 0.0, %v642
        %v644 = vpop.f32.mrf.mxu0
        %645 = vdwg.mxu0
        %v646 = vadd.f32 %v560, %v640
        %v647 = vadd.f32 %v561, %v643
        %v650 = vrot.slane %v498, 5
        %v651 = vrot.slane %v650, 4
        %v652 = vrot.slane %v499, 5
        %v653 = vsel %vm431, %v651, %v652
        %v654 = vrot.slane %v500, 5
        %v655 = vrot.slane %v654, 4
        %v656 = vrot.slane %v501, 5
        %v657 = vsel %vm431, %v655, %v656
        %s658 = scalar_lea.vmem %s3, 40
        %v659 = vld [vmem:[%s658] sm:$0xf]
        %v660 = vld [vmem:[%s658 + $0x4] sm:$0xf]
        %v661 = vunpack.c.l.b16 %v653
        %v662 = vunpack.c.l.b16 %v657
        %v663 = vpack.c.b16 %v662, %v661
        %v666 = vunpack.c.l.b16 %v659
        %v667 = vunpack.c.l.b16 %v660
        %v668 = vpack.c.b16 %v667, %v666
        %v671 = vsel %vm327, %v663, 0
        %673 = vmatprep.subr.bf16.mxu0 0
        %674 = vmatpush1.bf16.msra.mxu0 0
        %675 = vmatprep.subr.bf16.mxu0 0
        %676 = vmatpush1.bf16.msra.mxu0 0
        %677 = vmatprep.subr.bf16.mxu0 0
        %678 = vmatpush1.bf16.msra.mxu0 0
        %679 = vmatprep.subr.bf16.mxu0 0
        %680 = vmatpush1.bf16.msra.mxu0 0
        %681 = vmatprep.subr.bf16.mxu0 0
        %682 = vmatpush1.bf16.msra.mxu0 0
        %683 = vmatprep.subr.bf16.mxu0 0
        %684 = vmatpush1.bf16.msra.mxu0 0
        %685 = vmatprep.subr.bf16.mxu0 0
        %686 = vmatpush1.bf16.msra.mxu0 0
        %687 = vmatprep.subr.bf16.mxu0 0
        %688 = vmatpush1.bf16.msra.mxu0 %v668
        %689 = vmatprep.subr.bf16.mxu0 0
        %690 = vmatpush2.bf16.msra.mxu0 0
        %691 = vmatprep.subr.bf16.mxu0 0
        %692 = vmatpush2.bf16.msra.mxu0 0
        %693 = vmatprep.subr.bf16.mxu0 0
        %694 = vmatpush2.bf16.msra.mxu0 0
        %695 = vmatprep.subr.bf16.mxu0 0
        %696 = vmatpush2.bf16.msra.mxu0 0
        %697 = vmatprep.subr.bf16.mxu0 0
        %698 = vmatpush2.bf16.msra.mxu0 0
        %699 = vmatprep.subr.bf16.mxu0 0
        %700 = vmatpush2.bf16.msra.mxu0 0
        %701 = vmatprep.subr.bf16.mxu0 0
        %702 = vmatpush2.bf16.msra.mxu0 0
        %703 = vmatprep.subr.bf16.mxu0 0
        %704 = vmatpush2.bf16.msra.mxu0 0
        %705 = vmatprep.mubr.bf16.mxu0 0
        %706 = vmatmul.mubr.bf16.gmra.mxu0 %v671
        %v707 = vpop.f32.mrf.mxu0
        %v708 = vadd.f32 0.0, %v707
        %v709 = vpop.f32.mrf.mxu0
        %v710 = vpop.f32.mrf.mxu0
        %v711 = vadd.f32 0.0, %v710
        %v712 = vpop.f32.mrf.mxu0
        %713 = vdwg.mxu0
        %v714 = vadd.f32 %v646, %v708
        %v715 = vadd.f32 %v647, %v711
        %v716 = vld [vmem:[%s275] sm:$0xf]
        %v717 = vld [vmem:[%s275 + $0x4] sm:$0x1]
        %v718 = vld [vmem:[%s275 + $0x8] sm:$0xf]
        %v719 = vld [vmem:[%s275 + $0xc] sm:$0x1]
        %s720 = scalar_lea.vmem %s3, 48
        %v721 = vld [vmem:[%s720] sm:$0xf]
        %v722 = vld [vmem:[%s720 + $0x4] sm:$0xf]
        %v725 = vunpack.c.l.b16 %v716
        %v726 = vunpack.c.l.b16 %v718
        %v727 = vpack.c.b16 %v726, %v725
        %v730 = vunpack.c.l.b16 %v721
        %v731 = vunpack.c.l.b16 %v722
        %v732 = vpack.c.b16 %v731, %v730
        %v735 = vsel %vm327, %v727, 0
        %737 = vmatprep.subr.bf16.mxu0 0
        %738 = vmatpush1.bf16.msra.mxu0 0
        %739 = vmatprep.subr.bf16.mxu0 0
        %740 = vmatpush1.bf16.msra.mxu0 0
        %741 = vmatprep.subr.bf16.mxu0 0
        %742 = vmatpush1.bf16.msra.mxu0 0
        %743 = vmatprep.subr.bf16.mxu0 0
        %744 = vmatpush1.bf16.msra.mxu0 0
        %745 = vmatprep.subr.bf16.mxu0 0
        %746 = vmatpush1.bf16.msra.mxu0 0
        %747 = vmatprep.subr.bf16.mxu0 0
        %748 = vmatpush1.bf16.msra.mxu0 0
        %749 = vmatprep.subr.bf16.mxu0 0
        %750 = vmatpush1.bf16.msra.mxu0 0
        %751 = vmatprep.subr.bf16.mxu0 0
        %752 = vmatpush1.bf16.msra.mxu0 %v732
        %753 = vmatprep.subr.bf16.mxu0 0
        %754 = vmatpush2.bf16.msra.mxu0 0
        %755 = vmatprep.subr.bf16.mxu0 0
        %756 = vmatpush2.bf16.msra.mxu0 0
        %757 = vmatprep.subr.bf16.mxu0 0
        %758 = vmatpush2.bf16.msra.mxu0 0
        %759 = vmatprep.subr.bf16.mxu0 0
        %760 = vmatpush2.bf16.msra.mxu0 0
        %761 = vmatprep.subr.bf16.mxu0 0
        %762 = vmatpush2.bf16.msra.mxu0 0
        %763 = vmatprep.subr.bf16.mxu0 0
        %764 = vmatpush2.bf16.msra.mxu0 0
        %765 = vmatprep.subr.bf16.mxu0 0
        %766 = vmatpush2.bf16.msra.mxu0 0
        %767 = vmatprep.subr.bf16.mxu0 0
        %768 = vmatpush2.bf16.msra.mxu0 0
        %769 = vmatprep.mubr.bf16.mxu0 0
        %770 = vmatmul.mubr.bf16.gmra.mxu0 %v735
        %v771 = vpop.f32.mrf.mxu0
        %v772 = vadd.f32 0.0, %v771
        %v773 = vpop.f32.mrf.mxu0
        %v774 = vpop.f32.mrf.mxu0
        %v775 = vadd.f32 0.0, %v774
        %v776 = vpop.f32.mrf.mxu0
        %777 = vdwg.mxu0
        %v778 = vadd.f32 %v714, %v772
        %v779 = vadd.f32 %v715, %v775
        %v781 = vshrl.u32 %v716, 16
        %v783 = vrot.slane %v781, 4
        %v784 = vshll.u32 %v716, 16
        %v786 = vrot.slane %v784, 5
        %v787 = vor.u32 %v783, %v786
        %v788 = vrot.slane %v787, 4
        %v790 = vshll.u32 %v717, 16
        %v792 = vrot.slane %v790, 5
        %v793 = vsel %vm286, %v788, %v792
        %v795 = vshrl.u32 %v718, 16
        %v797 = vrot.slane %v795, 4
        %v798 = vshll.u32 %v718, 16
        %v800 = vrot.slane %v798, 5
        %v801 = vor.u32 %v797, %v800
        %v802 = vrot.slane %v801, 4
        %v804 = vshll.u32 %v719, 16
        %v806 = vrot.slane %v804, 5
        %v807 = vsel %vm286, %v802, %v806
        %s808 = scalar_lea.vmem %s3, 56
        %v809 = vld [vmem:[%s808] sm:$0xf]
        %v810 = vld [vmem:[%s808 + $0x4] sm:$0xf]
        %v811 = vunpack.c.l.b16 %v793
        %v812 = vunpack.c.l.b16 %v807
        %v813 = vpack.c.b16 %v812, %v811
        %v816 = vunpack.c.l.b16 %v809
        %v817 = vunpack.c.l.b16 %v810
        %v818 = vpack.c.b16 %v817, %v816
        %v821 = vsel %vm327, %v813, 0
        %823 = vmatprep.subr.bf16.mxu0 0
        %824 = vmatpush1.bf16.msra.mxu0 0
        %825 = vmatprep.subr.bf16.mxu0 0
        %826 = vmatpush1.bf16.msra.mxu0 0
        %827 = vmatprep.subr.bf16.mxu0 0
        %828 = vmatpush1.bf16.msra.mxu0 0
        %829 = vmatprep.subr.bf16.mxu0 0
        %830 = vmatpush1.bf16.msra.mxu0 0
        %831 = vmatprep.subr.bf16.mxu0 0
        %832 = vmatpush1.bf16.msra.mxu0 0
        %833 = vmatprep.subr.bf16.mxu0 0
        %834 = vmatpush1.bf16.msra.mxu0 0
        %835 = vmatprep.subr.bf16.mxu0 0
        %836 = vmatpush1.bf16.msra.mxu0 0
        %837 = vmatprep.subr.bf16.mxu0 0
        %838 = vmatpush1.bf16.msra.mxu0 %v818
        %839 = vmatprep.subr.bf16.mxu0 0
        %840 = vmatpush2.bf16.msra.mxu0 0
        %841 = vmatprep.subr.bf16.mxu0 0
        %842 = vmatpush2.bf16.msra.mxu0 0
        %843 = vmatprep.subr.bf16.mxu0 0
        %844 = vmatpush2.bf16.msra.mxu0 0
        %845 = vmatprep.subr.bf16.mxu0 0
        %846 = vmatpush2.bf16.msra.mxu0 0
        %847 = vmatprep.subr.bf16.mxu0 0
        %848 = vmatpush2.bf16.msra.mxu0 0
        %849 = vmatprep.subr.bf16.mxu0 0
        %850 = vmatpush2.bf16.msra.mxu0 0
        %851 = vmatprep.subr.bf16.mxu0 0
        %852 = vmatpush2.bf16.msra.mxu0 0
        %853 = vmatprep.subr.bf16.mxu0 0
        %854 = vmatpush2.bf16.msra.mxu0 0
        %855 = vmatprep.mubr.bf16.mxu0 0
        %856 = vmatmul.mubr.bf16.gmra.mxu0 %v821
        %v857 = vpop.f32.mrf.mxu0
        %v858 = vadd.f32 0.0, %v857
        %v859 = vpop.f32.mrf.mxu0
        %v860 = vpop.f32.mrf.mxu0
        %v861 = vadd.f32 0.0, %v860
        %v862 = vpop.f32.mrf.mxu0
        %863 = vdwg.mxu0
        %v864 = vadd.f32 %v778, %v858
        %v865 = vadd.f32 %v779, %v861
        %v868 = vrot.slane %v716, 5
        %v869 = vrot.slane %v868, 4
        %v870 = vrot.slane %v717, 5
        %v871 = vsel %vm431, %v869, %v870
        %v872 = vrot.slane %v718, 5
        %v873 = vrot.slane %v872, 4
        %v874 = vrot.slane %v719, 5
        %v875 = vsel %vm431, %v873, %v874
        %s876 = scalar_lea.vmem %s3, 64
        %v877 = vld [vmem:[%s876] sm:$0xf]
        %v878 = vld [vmem:[%s876 + $0x4] sm:$0xf]
        %v879 = vunpack.c.l.b16 %v871
        %v880 = vunpack.c.l.b16 %v875
        %v881 = vpack.c.b16 %v880, %v879
        %v884 = vunpack.c.l.b16 %v877
        %v885 = vunpack.c.l.b16 %v878
        %v886 = vpack.c.b16 %v885, %v884
        %v889 = vsel %vm327, %v881, 0
        %891 = vmatprep.subr.bf16.mxu0 0
        %892 = vmatpush1.bf16.msra.mxu0 0
        %893 = vmatprep.subr.bf16.mxu0 0
        %894 = vmatpush1.bf16.msra.mxu0 0
        %895 = vmatprep.subr.bf16.mxu0 0
        %896 = vmatpush1.bf16.msra.mxu0 0
        %897 = vmatprep.subr.bf16.mxu0 0
        %898 = vmatpush1.bf16.msra.mxu0 0
        %899 = vmatprep.subr.bf16.mxu0 0
        %900 = vmatpush1.bf16.msra.mxu0 0
        %901 = vmatprep.subr.bf16.mxu0 0
        %902 = vmatpush1.bf16.msra.mxu0 0
        %903 = vmatprep.subr.bf16.mxu0 0
        %904 = vmatpush1.bf16.msra.mxu0 0
        %905 = vmatprep.subr.bf16.mxu0 0
        %906 = vmatpush1.bf16.msra.mxu0 %v886
        %907 = vmatprep.subr.bf16.mxu0 0
        %908 = vmatpush2.bf16.msra.mxu0 0
        %909 = vmatprep.subr.bf16.mxu0 0
        %910 = vmatpush2.bf16.msra.mxu0 0
        %911 = vmatprep.subr.bf16.mxu0 0
        %912 = vmatpush2.bf16.msra.mxu0 0
        %913 = vmatprep.subr.bf16.mxu0 0
        %914 = vmatpush2.bf16.msra.mxu0 0
        %915 = vmatprep.subr.bf16.mxu0 0
        %916 = vmatpush2.bf16.msra.mxu0 0
        %917 = vmatprep.subr.bf16.mxu0 0
        %918 = vmatpush2.bf16.msra.mxu0 0
        %919 = vmatprep.subr.bf16.mxu0 0
        %920 = vmatpush2.bf16.msra.mxu0 0
        %921 = vmatprep.subr.bf16.mxu0 0
        %922 = vmatpush2.bf16.msra.mxu0 0
        %923 = vmatprep.mubr.bf16.mxu0 0
        %924 = vmatmul.mubr.bf16.gmra.mxu0 %v889
        %v925 = vpop.f32.mrf.mxu0
        %v926 = vadd.f32 0.0, %v925
        %v927 = vpop.f32.mrf.mxu0
        %v928 = vpop.f32.mrf.mxu0
        %v929 = vadd.f32 0.0, %v928
        %v930 = vpop.f32.mrf.mxu0
        %931 = vdwg.mxu0
        %v932 = vadd.f32 %v864, %v926
        %v933 = vadd.f32 %v865, %v929
        %v934 = vld [vmem:[%s4] sm:$0x1]
        %v936 = vlaneseq
        %v937 = vshrl.u32 %v936, 7
        %v938 = vsub.s32 0, %v937
        %v939 = vrot.slane %v934, %v938
        %v941 = vadd.f32 %v932, %v939
        %v942 = vadd.f32 %v933, %v939
        %v943 = vmax.f32 %v941, 0.0
        %v944 = vmax.f32 %v942, 0.0
        %v945 = vpack.c.bf16 %v943, %v943
        %v946 = vpack.c.bf16 %v944, %v944
        %vm947 = vcmask 257024
        %948 = vst.msk [vmem:[%s257] sm:$0xf] %vm947, %v945
        %949 = vst.msk [vmem:[%s257 + $0x4] sm:$0xf] %vm947, %v946
        %s950 = sand.u32 %s151, 1
        %s951 = scalar_lea.sflag [#allocation3], %s950
        %s952 = sand.u32 %s151, 1
        %s953 = smul.addr %s952, 8
        %s954 = scalar_lea.vmem [#allocation2], %s953
        // Predicated region
        $region41: #{tpu_custom_call.1} parent=39 // pred_check
          %p955 = pneg %p161
        $region42: #{tpu_custom_call.1} parent=39 // pred_check_branch
          %957 = sbr.rel (%p955) target = $region44
        $region43: #{tpu_custom_call.1} parent=39 // pred_region
          %s959 = ssub.s32 128, 128
          %960 = vsyncadd %s951, %s959
          %s961 = smul.addr %s19, 2
          %s962 = smul.addr %s961, 64
          %s963 = scalar_lea.hbm %s5, %s962
          %s964 = sshll.u32 %s954, 4
          %s965 = int_to_ptr.vmem [resolvable:$true] %s964
          %970 = dma.vmem_to_hbm [thread:$0]  %s965, 128, %s963, %s951, 64, 64, 4
        $region44: #{tpu_custom_call.1} parent=39 // pred_fallthru
          _
      $region40: #{tpu_custom_call.1} parent=5 // pred_fallthru
        _
      %p971 = scmp.le.s32.totalorder 2, %s14
      // Predicated region
      $region45: #{tpu_custom_call.1} parent=5 // pred_check
        %p972 = pneg %p971
      $region46: #{tpu_custom_call.1} parent=5 // pred_check_branch
        %974 = sbr.rel (%p972) target = $region48
      $region47: #{tpu_custom_call.1} parent=5 // pred_region
        %s975 = ssub.s32 %s14, 2
        // Predicated region
        $region49: #{tpu_custom_call.1} parent=47 // pred_check
          %p976 = pneg %p167
        $region50: #{tpu_custom_call.1} parent=47 // pred_check_branch
          %978 = sbr.rel (%p976) target = $region52
        $region51: #{tpu_custom_call.1} parent=47 // pred_region
          %s979 = sand.u32 %s152, 1
          %s980 = scalar_lea.sflag [#allocation3], %s979
          %s981 = sand.u32 %s152, 1
          %s982 = smul.addr %s981, 8
          %s983 = scalar_lea.vmem [#allocation2], %s982
          %984 = dma.done %s980, 128
        $region52: #{tpu_custom_call.1} parent=47 // pred_fallthru
          _
      $region48: #{tpu_custom_call.1} parent=5 // pred_fallthru
        _
    $region6: #{tpu_custom_call.1} parent=1 // loop_footer
      %s18 = sadd.s32 1, %s14
    $region7: #{tpu_custom_call.1} parent=1 // loop_footer_branch
      %13 = sbr.rel target = $region3
    $region8: #{tpu_custom_call.1} parent=1 // loop_exit
      _
    %985 = vsyncpa [#allocation3], 1
    %s986 = scalar_lea.sflag [#allocation3], 1
    %987 = vsyncpa %s986, 1

</llo_original>
